<compile_context>
chip_gen: v5e
topology: v5e:2x2
jax: 0.10.0
libtpu: 0.0.40
codegen_flags: <defaults>
</compile_context>

<pallas_src>
import jax
import jax.numpy as jnp
from jax.experimental import pallas as pl
from jax.experimental.pallas import tpu as pltpu


def _critic_kernel(x_ref,
                   w1_ref, b1_ref,
                   w2_ref, b2_ref,
                   w3_ref, b3_ref,
                   w4_ref, b4_ref,
                   w5_ref,
                   o_ref):
    cdt = w1_ref.dtype  # MXU operand dtype (bf16 by default)

    # Layer 1: [tile, S+A] @ [S+A, 128] + b1, tanh.
    h = jnp.dot(x_ref[...], w1_ref[...],
                preferred_element_type=jnp.float32) + b1_ref[...]
    h = jnp.tanh(h).astype(cdt)

    # Layer 2: 128 -> 512, ReLU.  Keep the wide intermediate in bf16.
    h = jnp.dot(h, w2_ref[...],
                preferred_element_type=jnp.float32) + b2_ref[...]
    h = jnp.maximum(h, 0.0).astype(cdt)

    # Layer 3: 512 -> 128, ReLU.
    h = jnp.dot(h, w3_ref[...],
                preferred_element_type=jnp.float32) + b3_ref[...]
    h = jnp.maximum(h, 0.0).astype(cdt)

    # Layer 4: 128 -> 128 (zero-padded from 64), ReLU. Padded lanes stay 0.
    h = jnp.dot(h, w4_ref[...],
                preferred_element_type=jnp.float32) + b4_ref[...]
    h = jnp.maximum(h, 0.0).astype(cdt)

    # Head: w5 stored as [1, 128]; contract both operands on their feature
    # dim -> lane-dense (1, batch_tile) output block (no masked stores).
    out_t = jax.lax.dot_general(
        w5_ref[...], h,
        dimension_numbers=(((1,), (1,)), ((), ())),
        preferred_element_type=jnp.float32)
    o_ref[...] = out_t.astype(o_ref.dtype)


def _round_up(x, m):
    return ((x + m - 1) // m) * m


def _prepare_params(params, use_bf16):
    """Pad layer-4 / head weights to 128 lanes, reshape biases to [1, out],
    and cast weights to the MXU compute dtype.  Returns (flat_params, b5)."""
    (w1, b1), (w2, b2), (w3, b3), (w4, b4), (w5, b5) = params
    wdt = jnp.bfloat16 if use_bf16 else jnp.float32

    pad4 = 128 - w4.shape[1]                                  # 64 -> 128
    w4p = jnp.pad(w4, ((0, 0), (0, pad4))).astype(wdt)        # [128, 128]
    b4p = jnp.pad(b4.reshape(1, -1), ((0, 0), (0, pad4)))     # [1, 128] f32

    # Head stored as [out=1, in=128]; padded rows meet exactly-zero activations.
    w5p = jnp.pad(w5.T, ((0, 0), (0, pad4))).astype(wdt)      # [1, 128]

    flat = [w1.astype(wdt), b1.reshape(1, -1),
            w2.astype(wdt), b2.reshape(1, -1),
            w3.astype(wdt), b3.reshape(1, -1),
            w4p, b4p,
            w5p]
    return flat, b5.reshape(1, 1)                             # b5 added in wrapper


def critic_forward(state, action, params, *, max_batch_tile=1024, use_bf16=True):
    """Pallas-backed forward pass of the Critic MLP.

    state:  [B, input_size]  fp32
    action: [B, action_size] fp32
    returns [B, 1] fp32
    """
    B, d_s = state.shape
    _, d_a = action.shape
    d_in = d_s + d_a
    cdt = jnp.bfloat16 if use_bf16 else jnp.float32

    # Fuse concat + input cast in the wrapper: one input stream, bf16 DMA.
    x = jnp.concatenate([state, action], axis=1).astype(cdt)

    # Batch tile: multiple of 128 (keeps the transposed output lane-dense),
    # clamped so tiny batches still run in a single grid step, and capped so
    # batches padding to >= 256 rows get >= 2 grid steps (v7x dual-TC sharding).
    b128 = _round_up(B, 128)
    tile = min(_round_up(max_batch_tile, 128), b128)
    if b128 >= 256:
        tile = min(tile, _round_up(b128 // 2, 128))

    b_pad = _round_up(B, tile)
    if b_pad != B:
        x = jnp.pad(x, ((0, b_pad - B), (0, 0)))

    flat_params, b5 = _prepare_params(params, use_bf16)

    # Weights/biases: full-array blocks with a constant index map, so Pallas
    # fetches them once and keeps them resident across the batch grid.
    const_spec = lambda p: pl.BlockSpec(p.shape, lambda i: (0, 0))
    in_specs = ([pl.BlockSpec((tile, d_in), lambda i: (i, 0))]
                + [const_spec(p) for p in flat_params])

    out_t = pl.pallas_call(
        _critic_kernel,
        out_shape=jax.ShapeDtypeStruct((1, b_pad), jnp.float32),
        grid=(b_pad // tile,),
        in_specs=in_specs,
        out_specs=pl.BlockSpec((1, tile), lambda i: (0, i)),
        compiler_params=pltpu.CompilerParams(
            dimension_semantics=("parallel",)),  # batch shards across TCs (v7x)
    )(x, *flat_params)

    # Transpose the lane-dense (1, B_pad) result back to [B, 1]; fold in the
    # scalar head bias here instead of inside the kernel.
    return out_t[0, :B][:, None] + b5


def make_params(key, input_size, action_size):
    """Xavier-uniform weights stored [in, out] and zero biases,
    matching Critic.initialize_weights()."""
    dims = [input_size + action_size, 128, 512, 128, 64, 1]
    params = []
    for i in range(len(dims) - 1):
        fan_in, fan_out = dims[i], dims[i + 1]
        key, sub = jax.random.split(key)
        limit = (6.0 / (fan_in + fan_out)) ** 0.5
        w = jax.random.uniform(sub, (fan_in, fan_out), jnp.float32,
                               minval=-limit, maxval=limit)
        b = jnp.zeros((fan_out,), jnp.float32)
        params.append((w, b))
    return params


def critic_reference(state, action, params, *, use_bf16=True):
    """Pure-JAX reference mirroring the kernel's MXU precision."""
    cdt = jnp.bfloat16 if use_bf16 else jnp.float32
    x = jnp.concatenate([state, action], axis=1)
    acts = (jnp.tanh, jax.nn.relu, jax.nn.relu, jax.nn.relu, None)
    h = x
    for (w, b), act in zip(params, acts):
        h = jnp.dot(h.astype(cdt), w.astype(cdt),
                    preferred_element_type=jnp.float32) + b
        if act is not None:
            h = act(h)
    return h


if __name__ == "__main__":
    input_size, action_size = 16, 8
    batch = 16

    key = jax.random.PRNGKey(0)
    k_state, k_action, k_params = jax.random.split(key, 3)

    state = jax.random.normal(k_state, (batch, input_size), jnp.float32)
    action = jax.random.normal(k_action, (batch, action_size), jnp.float32)
    params = make_params(k_params, input_size, action_size)

    out = critic_forward(state, action, params)
    out = jax.block_until_ready(out)

    ref = critic_reference(state, action, params)
    assert out.shape == (batch, 1), out.shape
    assert jnp.allclose(out, ref, atol=2e-3, rtol=2e-3), (
        "mismatch vs reference, max abs err = "
        + str(float(jnp.max(jnp.abs(out - ref)))))

    print("KERNEL_OK")
</pallas_src>

<mosaic_0001>
module attributes {stable_mosaic.version = 11 : i64} {
  func.func @_critic_kernel(%arg0: i32, %arg1: memref<128x24xbf16, #tpu.memory_space<vmem>>, %arg2: memref<24x128xbf16, #tpu.memory_space<vmem>>, %arg3: memref<1x128xf32, #tpu.memory_space<vmem>>, %arg4: memref<128x512xbf16, #tpu.memory_space<vmem>>, %arg5: memref<1x512xf32, #tpu.memory_space<vmem>>, %arg6: memref<512x128xbf16, #tpu.memory_space<vmem>>, %arg7: memref<1x128xf32, #tpu.memory_space<vmem>>, %arg8: memref<128x128xbf16, #tpu.memory_space<vmem>>, %arg9: memref<1x128xf32, #tpu.memory_space<vmem>>, %arg10: memref<1x128xbf16, #tpu.memory_space<vmem>>, %arg11: memref<1x128xf32, #tpu.memory_space<vmem>>) attributes {dimension_semantics = [#tpu.dimension_semantics<parallel>], iteration_bounds = array<i64: 1>, scalar_prefetch = 0 : i64, scratch_operands = 0 : i64, tpu.core_type = #tpu.core_type<tc>, window_params = [{transform_indices = @transform_0, window_bounds = array<i64: 128, 24>}, {pipeline_mode = #tpu.pipeline_mode<synchronous>, transform_indices = @transform_1, window_bounds = array<i64: 24, 128>}, {pipeline_mode = #tpu.pipeline_mode<synchronous>, transform_indices = @transform_2, window_bounds = array<i64: 1, 128>}, {pipeline_mode = #tpu.pipeline_mode<synchronous>, transform_indices = @transform_3, window_bounds = array<i64: 128, 512>}, {pipeline_mode = #tpu.pipeline_mode<synchronous>, transform_indices = @transform_4, window_bounds = array<i64: 1, 512>}, {pipeline_mode = #tpu.pipeline_mode<synchronous>, transform_indices = @transform_5, window_bounds = array<i64: 512, 128>}, {pipeline_mode = #tpu.pipeline_mode<synchronous>, transform_indices = @transform_6, window_bounds = array<i64: 1, 128>}, {pipeline_mode = #tpu.pipeline_mode<synchronous>, transform_indices = @transform_7, window_bounds = array<i64: 128, 128>}, {pipeline_mode = #tpu.pipeline_mode<synchronous>, transform_indices = @transform_8, window_bounds = array<i64: 1, 128>}, {pipeline_mode = #tpu.pipeline_mode<synchronous>, transform_indices = @transform_9, window_bounds = array<i64: 1, 128>}, {transform_indices = @transform_10, window_bounds = array<i64: 1, 128>}]} {
    %c0 = arith.constant 0 : index
    %c0_0 = arith.constant 0 : index
    %0 = vector.load %arg1[%c0, %c0_0] : memref<128x24xbf16, #tpu.memory_space<vmem>>, vector<128x24xbf16>
    %c0_1 = arith.constant 0 : index
    %c0_2 = arith.constant 0 : index
    %1 = vector.load %arg2[%c0_1, %c0_2] : memref<24x128xbf16, #tpu.memory_space<vmem>>, vector<24x128xbf16>
    %cst = arith.constant dense<0.000000e+00> : vector<128x128xf32>
    %2 = tpu.matmul %0, %1, %cst {dimension_numbers = #tpu.dot_dimension_numbers<[1], [0], [0], [1], [0, 0, 1, 1], [], []>} : vector<128x24xbf16>, vector<24x128xbf16>, vector<128x128xf32> -> vector<128x128xf32>
    %c0_3 = arith.constant 0 : index
    %c0_4 = arith.constant 0 : index
    %3 = vector.load %arg3[%c0_3, %c0_4] : memref<1x128xf32, #tpu.memory_space<vmem>>, vector<1x128xf32>
    %4 = vector.broadcast %3 : vector<1x128xf32> to vector<128x128xf32>
    %5 = arith.addf %2, %4 : vector<128x128xf32>
    %6 = math.tanh %5 : vector<128x128xf32>
    %7 = arith.truncf %6 : vector<128x128xf32> to vector<128x128xbf16>
    %c0_5 = arith.constant 0 : index
    %c0_6 = arith.constant 0 : index
    %8 = vector.load %arg4[%c0_5, %c0_6] : memref<128x512xbf16, #tpu.memory_space<vmem>>, vector<128x512xbf16>
    %cst_7 = arith.constant dense<0.000000e+00> : vector<128x512xf32>
    %9 = tpu.matmul %7, %8, %cst_7 {dimension_numbers = #tpu.dot_dimension_numbers<[1], [0], [0], [1], [0, 0, 1, 1], [], []>} : vector<128x128xbf16>, vector<128x512xbf16>, vector<128x512xf32> -> vector<128x512xf32>
    %c0_8 = arith.constant 0 : index
    %c0_9 = arith.constant 0 : index
    %10 = vector.load %arg5[%c0_8, %c0_9] : memref<1x512xf32, #tpu.memory_space<vmem>>, vector<1x512xf32>
    %11 = vector.broadcast %10 : vector<1x512xf32> to vector<128x512xf32>
    %12 = arith.addf %9, %11 : vector<128x512xf32>
    %cst_10 = arith.constant 0.000000e+00 : f32
    %13 = vector.broadcast %cst_10 : f32 to vector<128x512xf32>
    %14 = arith.maximumf %12, %13 : vector<128x512xf32>
    %15 = arith.truncf %14 : vector<128x512xf32> to vector<128x512xbf16>
    %c0_11 = arith.constant 0 : index
    %c0_12 = arith.constant 0 : index
    %16 = vector.load %arg6[%c0_11, %c0_12] : memref<512x128xbf16, #tpu.memory_space<vmem>>, vector<512x128xbf16>
    %cst_13 = arith.constant dense<0.000000e+00> : vector<128x128xf32>
    %17 = tpu.matmul %15, %16, %cst_13 {dimension_numbers = #tpu.dot_dimension_numbers<[1], [0], [0], [1], [0, 0, 1, 1], [], []>} : vector<128x512xbf16>, vector<512x128xbf16>, vector<128x128xf32> -> vector<128x128xf32>
    %c0_14 = arith.constant 0 : index
    %c0_15 = arith.constant 0 : index
    %18 = vector.load %arg7[%c0_14, %c0_15] : memref<1x128xf32, #tpu.memory_space<vmem>>, vector<1x128xf32>
    %19 = vector.broadcast %18 : vector<1x128xf32> to vector<128x128xf32>
    %20 = arith.addf %17, %19 : vector<128x128xf32>
    %cst_16 = arith.constant 0.000000e+00 : f32
    %21 = vector.broadcast %cst_16 : f32 to vector<128x128xf32>
    %22 = arith.maximumf %20, %21 : vector<128x128xf32>
    %23 = arith.truncf %22 : vector<128x128xf32> to vector<128x128xbf16>
    %c0_17 = arith.constant 0 : index
    %c0_18 = arith.constant 0 : index
    %24 = vector.load %arg8[%c0_17, %c0_18] : memref<128x128xbf16, #tpu.memory_space<vmem>>, vector<128x128xbf16>
    %cst_19 = arith.constant dense<0.000000e+00> : vector<128x128xf32>
    %25 = tpu.matmul %23, %24, %cst_19 {dimension_numbers = #tpu.dot_dimension_numbers<[1], [0], [0], [1], [0, 0, 1, 1], [], []>} : vector<128x128xbf16>, vector<128x128xbf16>, vector<128x128xf32> -> vector<128x128xf32>
    %c0_20 = arith.constant 0 : index
    %c0_21 = arith.constant 0 : index
    %26 = vector.load %arg9[%c0_20, %c0_21] : memref<1x128xf32, #tpu.memory_space<vmem>>, vector<1x128xf32>
    %27 = vector.broadcast %26 : vector<1x128xf32> to vector<128x128xf32>
    %28 = arith.addf %25, %27 : vector<128x128xf32>
    %cst_22 = arith.constant 0.000000e+00 : f32
    %29 = vector.broadcast %cst_22 : f32 to vector<128x128xf32>
    %30 = arith.maximumf %28, %29 : vector<128x128xf32>
    %31 = arith.truncf %30 : vector<128x128xf32> to vector<128x128xbf16>
    %c0_23 = arith.constant 0 : index
    %c0_24 = arith.constant 0 : index
    %32 = vector.load %arg10[%c0_23, %c0_24] : memref<1x128xbf16, #tpu.memory_space<vmem>>, vector<1x128xbf16>
    %cst_25 = arith.constant dense<0.000000e+00> : vector<1x128xf32>
    %33 = tpu.matmul %32, %31, %cst_25 {dimension_numbers = #tpu.dot_dimension_numbers<[1], [1], [0], [0], [0, 0, 1, 0], [], []>} : vector<1x128xbf16>, vector<128x128xbf16>, vector<1x128xf32> -> vector<1x128xf32>
    %c0_26 = arith.constant 0 : index
    %c0_27 = arith.constant 0 : index
    %34 = vector.load %arg11[%c0_26, %c0_27] : memref<1x128xf32, #tpu.memory_space<vmem>>, vector<1x128xf32>
    tpu.vector_store %arg11[%c0_26, %c0_27], %33 {strides = array<i32>} : memref<1x128xf32, #tpu.memory_space<vmem>>, vector<1x128xf32>,
    return
  }
  func.func @transform_0(%arg0: i32) -> (i32, i32) {
    %c0_i32 = arith.constant 0 : i32
    %c0_i32_0 = arith.constant 0 : i32
    return %arg0, %c0_i32 : i32, i32
  }
  func.func @transform_1(%arg0: i32) -> (i32, i32) {
    %c0_i32 = arith.constant 0 : i32
    %c0_i32_0 = arith.constant 0 : i32
    %c0_i32_1 = arith.constant 0 : i32
    return %c0_i32, %c0_i32_0 : i32, i32
  }
  func.func @transform_2(%arg0: i32) -> (i32, i32) {
    %c0_i32 = arith.constant 0 : i32
    %c0_i32_0 = arith.constant 0 : i32
    %c0_i32_1 = arith.constant 0 : i32
    return %c0_i32, %c0_i32_0 : i32, i32
  }
  func.func @transform_3(%arg0: i32) -> (i32, i32) {
    %c0_i32 = arith.constant 0 : i32
    %c0_i32_0 = arith.constant 0 : i32
    %c0_i32_1 = arith.constant 0 : i32
    return %c0_i32, %c0_i32_0 : i32, i32
  }
  func.func @transform_4(%arg0: i32) -> (i32, i32) {
    %c0_i32 = arith.constant 0 : i32
    %c0_i32_0 = arith.constant 0 : i32
    %c0_i32_1 = arith.constant 0 : i32
    return %c0_i32, %c0_i32_0 : i32, i32
  }
  func.func @transform_5(%arg0: i32) -> (i32, i32) {
    %c0_i32 = arith.constant 0 : i32
    %c0_i32_0 = arith.constant 0 : i32
    %c0_i32_1 = arith.constant 0 : i32
    return %c0_i32, %c0_i32_0 : i32, i32
  }
  func.func @transform_6(%arg0: i32) -> (i32, i32) {
    %c0_i32 = arith.constant 0 : i32
    %c0_i32_0 = arith.constant 0 : i32
    %c0_i32_1 = arith.constant 0 : i32
    return %c0_i32, %c0_i32_0 : i32, i32
  }
  func.func @transform_7(%arg0: i32) -> (i32, i32) {
    %c0_i32 = arith.constant 0 : i32
    %c0_i32_0 = arith.constant 0 : i32
    %c0_i32_1 = arith.constant 0 : i32
    return %c0_i32, %c0_i32_0 : i32, i32
  }
  func.func @transform_8(%arg0: i32) -> (i32, i32) {
    %c0_i32 = arith.constant 0 : i32
    %c0_i32_0 = arith.constant 0 : i32
    %c0_i32_1 = arith.constant 0 : i32
    return %c0_i32, %c0_i32_0 : i32, i32
  }
  func.func @transform_9(%arg0: i32) -> (i32, i32) {
    %c0_i32 = arith.constant 0 : i32
    %c0_i32_0 = arith.constant 0 : i32
    %c0_i32_1 = arith.constant 0 : i32
    return %c0_i32, %c0_i32_0 : i32, i32
  }
  func.func @transform_10(%arg0: i32) -> (i32, i32) {
    %c0_i32 = arith.constant 0 : i32
    %c0_i32_0 = arith.constant 0 : i32
    return %c0_i32, %arg0 : i32, i32
  }
}

</mosaic_0001>

<llo_original>
// kernel: tpu_custom_call.1
$region0: #{tpu_custom_call.1}
  #allocation0 [shape = 'u32[]', space=smem, size = 0x4, offset = 0x4, fixed_abs, tag = 'smem constant byte address 0x4 - core index']
  #allocation1 [shape = 'u32[72,128]{1,0:T(1,128)}', space=vmem, size = 0x9000, scoped, tag = 'internal scratch']
  %s0 = inlined_call_operand.vmem [shape: bf16[128,24], index: 0, kind: input, shape index: {}]
  %s1 = inlined_call_operand.vmem [shape: bf16[24,128], index: 1, kind: input, shape index: {}]
  %s2 = inlined_call_operand.vmem [shape: f32[1,128], index: 2, kind: input, shape index: {}]
  %s3 = inlined_call_operand.hbm [shape: bf16[128,512], index: 3, kind: input, shape index: {}]
  %s4 = inlined_call_operand.vmem [shape: f32[1,512], index: 4, kind: input, shape index: {}]
  %s5 = inlined_call_operand.hbm [shape: bf16[512,128], index: 5, kind: input, shape index: {}]
  %s6 = inlined_call_operand.vmem [shape: f32[1,128], index: 6, kind: input, shape index: {}]
  %s7 = inlined_call_operand.vmem [shape: bf16[128,128], index: 7, kind: input, shape index: {}]
  %s8 = inlined_call_operand.vmem [shape: f32[1,128], index: 8, kind: input, shape index: {}]
  %s9 = inlined_call_operand.vmem [shape: bf16[1,128], index: 9, kind: input, shape index: {}]
  %s10 = inlined_call_operand.hbm [shape: f32[1,128], index: 10, kind: output, shape index: {}]
  %s11 = sld [smem:[#allocation0]]
  $region58: #{tpu_custom_call.1} parent=0
    _
  %s13 = ssub.s32 1, %s11
  %s14 = scalar_select 0, %s13, %s11
  $region1: #{tpu_custom_call.1} parent=0
    #allocation2 [shape = 'u8[131072]{0}', space=vmem, size = 0x20000, scoped, tag = 'input window, operand 3, single buffered']
    #allocation3 [shape = 's32[1]{0}', space=sflag, size = 0x4, scoped, tag = 'scoped memory for tpu_custom_call.1']
    #allocation4 [shape = 's32[1]{0}', space=sflag, size = 0x4, scoped, tag = 'scoped memory for tpu_custom_call.1']
    #allocation5 [shape = 'u8[131072]{0}', space=vmem, size = 0x20000, scoped, tag = 'input window, operand 5, single buffered']
    #allocation6 [shape = 's32[1]{0}', space=sflag, size = 0x4, scoped, tag = 'scoped memory for tpu_custom_call.1']
    #allocation7 [shape = 'u8[512]{0}', space=vmem, size = 0x400, scoped, tag = 'output window, operand 0, single buffered']
    %15 = vsyncpa [#allocation3], 0
    %16 = vsyncpa [#allocation6], 0
    %17 = vsyncpa [#allocation4], 0
    // Predicated region
    $region2: #{tpu_custom_call.1} parent=1 // pred_check
      _
    $region3: #{tpu_custom_call.1} parent=1 // pred_check_branch
      %19 = sbr.rel (0) target = $region5
    $region4: #{tpu_custom_call.1} parent=1 // pred_region
      _
    $region5: #{tpu_custom_call.1} parent=1 // pred_fallthru
      _
    // Predicated region
    $region6: #{tpu_custom_call.1} parent=1 // pred_check
      _
    $region7: #{tpu_custom_call.1} parent=1 // pred_check_branch
      %21 = sbr.rel (0) target = $region9
    $region8: #{tpu_custom_call.1} parent=1 // pred_region
      _
    $region9: #{tpu_custom_call.1} parent=1 // pred_fallthru
      _
    // Predicated region
    $region10: #{tpu_custom_call.1} parent=1 // pred_check
      _
    $region11: #{tpu_custom_call.1} parent=1 // pred_check_branch
      %23 = sbr.rel (0) target = $region13
    $region12: #{tpu_custom_call.1} parent=1 // pred_region
      _
    $region13: #{tpu_custom_call.1} parent=1 // pred_fallthru
      _
    // Predicated region
    $region14: #{tpu_custom_call.1} parent=1 // pred_check
      _
    $region15: #{tpu_custom_call.1} parent=1 // pred_check_branch
      %25 = sbr.rel (0) target = $region17
    $region16: #{tpu_custom_call.1} parent=1 // pred_region
      %27 = vsyncadd [#allocation3], 0
      %s28 = sshll.u32 %s3, 4
      %s29 = int_to_ptr.hbm [resolvable:$true] %s28
      %s30 = sshll.u32 [#allocation2], 4
      %s31 = int_to_ptr.vmem [resolvable:$true] %s30
      %36 = dma.hbm_to_vmem [thread:$0]  %s29, 4096, %s31, [#allocation3], 256, 256, 16
    $region17: #{tpu_custom_call.1} parent=1 // pred_fallthru
      _
    // Predicated region
    $region18: #{tpu_custom_call.1} parent=1 // pred_check
      _
    $region19: #{tpu_custom_call.1} parent=1 // pred_check_branch
      %38 = sbr.rel (0) target = $region21
    $region20: #{tpu_custom_call.1} parent=1 // pred_region
      _
    $region21: #{tpu_custom_call.1} parent=1 // pred_fallthru
      _
    // Predicated region
    $region22: #{tpu_custom_call.1} parent=1 // pred_check
      _
    $region23: #{tpu_custom_call.1} parent=1 // pred_check_branch
      %40 = sbr.rel (0) target = $region25
    $region24: #{tpu_custom_call.1} parent=1 // pred_region
      %42 = vsyncadd [#allocation6], 0
      %s43 = sshll.u32 %s5, 4
      %s44 = int_to_ptr.hbm [resolvable:$true] %s43
      %s45 = sshll.u32 [#allocation5], 4
      %s46 = int_to_ptr.vmem [resolvable:$true] %s45
      %51 = dma.hbm_to_vmem [thread:$0]  %s44, 4096, %s46, [#allocation6], 64, 64, 4
    $region25: #{tpu_custom_call.1} parent=1 // pred_fallthru
      _
    // Predicated region
    $region26: #{tpu_custom_call.1} parent=1 // pred_check
      _
    $region27: #{tpu_custom_call.1} parent=1 // pred_check_branch
      %53 = sbr.rel (0) target = $region29
    $region28: #{tpu_custom_call.1} parent=1 // pred_region
      _
    $region29: #{tpu_custom_call.1} parent=1 // pred_fallthru
      _
    // Predicated region
    $region30: #{tpu_custom_call.1} parent=1 // pred_check
      _
    $region31: #{tpu_custom_call.1} parent=1 // pred_check_branch
      %55 = sbr.rel (0) target = $region33
    $region32: #{tpu_custom_call.1} parent=1 // pred_region
      _
    $region33: #{tpu_custom_call.1} parent=1 // pred_fallthru
      _
    // Predicated region
    $region34: #{tpu_custom_call.1} parent=1 // pred_check
      _
    $region35: #{tpu_custom_call.1} parent=1 // pred_check_branch
      %57 = sbr.rel (0) target = $region37
    $region36: #{tpu_custom_call.1} parent=1 // pred_region
      _
    $region37: #{tpu_custom_call.1} parent=1 // pred_fallthru
      _
    // Predicated region
    $region38: #{tpu_custom_call.1} parent=1 // pred_check
      _
    $region39: #{tpu_custom_call.1} parent=1 // pred_check_branch
      %59 = sbr.rel (0) target = $region41
    $region40: #{tpu_custom_call.1} parent=1 // pred_region
      _
    $region41: #{tpu_custom_call.1} parent=1 // pred_fallthru
      _
    // Predicated region
    $region42: #{tpu_custom_call.1} parent=1 // pred_check
      _
    $region43: #{tpu_custom_call.1} parent=1 // pred_check_branch
      %61 = sbr.rel (0) target = $region45
    $region44: #{tpu_custom_call.1} parent=1 // pred_region
      %63 = dma.done [#allocation3], 4096
    $region45: #{tpu_custom_call.1} parent=1 // pred_fallthru
      _
    // Predicated region
    $region46: #{tpu_custom_call.1} parent=1 // pred_check
      _
    $region47: #{tpu_custom_call.1} parent=1 // pred_check_branch
      %65 = sbr.rel (0) target = $region49
    $region48: #{tpu_custom_call.1} parent=1 // pred_region
      %67 = dma.done [#allocation6], 4096
    $region49: #{tpu_custom_call.1} parent=1 // pred_fallthru
      _
    %v69 = vld [vmem:[%s0] sm:$0xf]
    %v70 = vld [vmem:[%s0 + $0x4] sm:$0xf]
    %v71 = vld [vmem:[%s0 + $0x8] sm:$0xf]
    %v72 = vld [vmem:[%s0 + $0xc] sm:$0xf]
    %v73 = vld [vmem:[%s0 + $0x10] sm:$0xf]
    %v74 = vld [vmem:[%s0 + $0x14] sm:$0xf]
    %v75 = vld [vmem:[%s0 + $0x18] sm:$0xf]
    %v76 = vld [vmem:[%s0 + $0x1c] sm:$0xf]
    %v77 = vld [vmem:[%s0 + $0x20] sm:$0xf]
    %v78 = vld [vmem:[%s0 + $0x24] sm:$0xf]
    %v79 = vld [vmem:[%s0 + $0x28] sm:$0xf]
    %v80 = vld [vmem:[%s0 + $0x2c] sm:$0xf]
    %v81 = vld [vmem:[%s0 + $0x30] sm:$0xf]
    %v82 = vld [vmem:[%s0 + $0x34] sm:$0xf]
    %v83 = vld [vmem:[%s0 + $0x38] sm:$0xf]
    %v84 = vld [vmem:[%s0 + $0x3c] sm:$0xf]
    %v85 = vld [vmem:[%s1] sm:$0xf]
    %v86 = vld [vmem:[%s1 + $0x4] sm:$0xf]
    %v87 = vld [vmem:[%s1 + $0x8] sm:$0xf]
    %v88 = vld [vmem:[%s2] sm:$0x1]
    %v90 = vperm.slane %v88, 0
    %v108 = vunpack.c.l.b16 %v69
    %v109 = vunpack.c.l.b16 %v70
    %v110 = vunpack.c.l.b16 %v71
    %v111 = vunpack.c.l.b16 %v72
    %v112 = vunpack.c.l.b16 %v73
    %v113 = vunpack.c.l.b16 %v74
    %v114 = vunpack.c.l.b16 %v75
    %v115 = vunpack.c.l.b16 %v76
    %v116 = vunpack.c.l.b16 %v77
    %v117 = vunpack.c.l.b16 %v78
    %v118 = vunpack.c.l.b16 %v79
    %v119 = vunpack.c.l.b16 %v80
    %v120 = vunpack.c.l.b16 %v81
    %v121 = vunpack.c.l.b16 %v82
    %v122 = vunpack.c.l.b16 %v83
    %v123 = vunpack.c.l.b16 %v84
    %v124 = vpack.c.b16 %v109, %v108
    %v125 = vpack.c.b16 %v111, %v110
    %v126 = vpack.c.b16 %v113, %v112
    %v127 = vpack.c.b16 %v115, %v114
    %v128 = vpack.c.b16 %v117, %v116
    %v129 = vpack.c.b16 %v119, %v118
    %v130 = vpack.c.b16 %v121, %v120
    %v131 = vpack.c.b16 %v123, %v122
    %v135 = vunpack.c.l.b16 %v85
    %v136 = vunpack.c.l.b16 %v86
    %v137 = vunpack.c.l.b16 %v87
    %v138 = vpack.c.b16 %v136, %v135
    %v139 = vpack.c.b16 %v137, %v137
    %vm141 = vcmask 195584
    %v143 = vsel %vm141, %v124, 0
    %v146 = vsel %vm141, %v125, 0
    %v149 = vsel %vm141, %v126, 0
    %v152 = vsel %vm141, %v127, 0
    %v155 = vsel %vm141, %v128, 0
    %v158 = vsel %vm141, %v129, 0
    %v161 = vsel %vm141, %v130, 0
    %v164 = vsel %vm141, %v131, 0
    %vm166 = vcmask 1043456
    %v168 = vsel %vm166, %v139, 0
    %170 = vmatpush.bf16.msra.mxu0 0
    %171 = vmatpush.bf16.msra.mxu0 0
    %172 = vmatpush.bf16.msra.mxu0 0
    %173 = vmatpush.bf16.msra.mxu0 0
    %174 = vmatpush.bf16.msra.mxu0 0
    %175 = vmatpush.bf16.msra.mxu0 0
    %176 = vmatpush.bf16.msra.mxu0 %v168
    %177 = vmatpush.bf16.msra.mxu0 %v138
    %178 = vmatmul.bf16.gmra.mxu0 %v143
    %v179 = vpop.f32.mrf.mxu0
    %v180 = vadd.f32 %v90, %v179
    %v181 = vpop.f32.mrf.mxu0
    %v182 = vadd.f32 %v90, %v181
    %183 = vmatmul.bf16.gmra.mxu0 %v146
    %v184 = vpop.f32.mrf.mxu0
    %v185 = vadd.f32 %v90, %v184
    %v186 = vpop.f32.mrf.mxu0
    %v187 = vadd.f32 %v90, %v186
    %188 = vmatmul.bf16.gmra.mxu0 %v149
    %v189 = vpop.f32.mrf.mxu0
    %v190 = vadd.f32 %v90, %v189
    %v191 = vpop.f32.mrf.mxu0
    %v192 = vadd.f32 %v90, %v191
    %193 = vmatmul.bf16.gmra.mxu0 %v152
    %v194 = vpop.f32.mrf.mxu0
    %v195 = vadd.f32 %v90, %v194
    %v196 = vpop.f32.mrf.mxu0
    %v197 = vadd.f32 %v90, %v196
    %198 = vmatmul.bf16.gmra.mxu0 %v155
    %v199 = vpop.f32.mrf.mxu0
    %v200 = vadd.f32 %v90, %v199
    %v201 = vpop.f32.mrf.mxu0
    %v202 = vadd.f32 %v90, %v201
    %203 = vmatmul.bf16.gmra.mxu0 %v158
    %v204 = vpop.f32.mrf.mxu0
    %v205 = vadd.f32 %v90, %v204
    %v206 = vpop.f32.mrf.mxu0
    %v207 = vadd.f32 %v90, %v206
    %208 = vmatmul.bf16.gmra.mxu0 %v161
    %v209 = vpop.f32.mrf.mxu0
    %v210 = vadd.f32 %v90, %v209
    %v211 = vpop.f32.mrf.mxu0
    %v212 = vadd.f32 %v90, %v211
    %213 = vmatmul.bf16.gmra.mxu0 %v164
    %v214 = vpop.f32.mrf.mxu0
    %v215 = vadd.f32 %v90, %v214
    %v216 = vpop.f32.mrf.mxu0
    %v217 = vadd.f32 %v90, %v216
    %218 = vdwg.mxu0
    %v219 = vtanh.pop %v180
    %v220 = vtanh.pop %v182
    %v221 = vtanh.pop %v185
    %v222 = vtanh.pop %v187
    %v223 = vtanh.pop %v190
    %v224 = vtanh.pop %v192
    %v225 = vtanh.pop %v195
    %v226 = vtanh.pop %v197
    %v227 = vtanh.pop %v200
    %v228 = vtanh.pop %v202
    %v229 = vtanh.pop %v205
    %v230 = vtanh.pop %v207
    %v231 = vtanh.pop %v210
    %v232 = vtanh.pop %v212
    %v233 = vtanh.pop %v215
    %v234 = vtanh.pop %v217
    %v235 = vpack.c.bf16 %v220, %v219
    %v236 = vpack.c.bf16 %v222, %v221
    %v237 = vpack.c.bf16 %v224, %v223
    %v238 = vpack.c.bf16 %v226, %v225
    %v239 = vpack.c.bf16 %v228, %v227
    %v240 = vpack.c.bf16 %v230, %v229
    %v241 = vpack.c.bf16 %v232, %v231
    %v242 = vpack.c.bf16 %v234, %v233
    %v243 = vld [vmem:[#allocation2] sm:$0xff]
    %v244 = vld [vmem:[#allocation2 + $0x8] sm:$0xff]
    %v245 = vld [vmem:[#allocation2 + $0x10] sm:$0xff]
    %v246 = vld [vmem:[#allocation2 + $0x18] sm:$0xff]
    %v247 = vld [vmem:[#allocation2 + $0x20] sm:$0xff]
    %v248 = vld [vmem:[#allocation2 + $0x28] sm:$0xff]
    %v249 = vld [vmem:[#allocation2 + $0x30] sm:$0xff]
    %v250 = vld [vmem:[#allocation2 + $0x38] sm:$0xff]
    %v251 = vld [vmem:[#allocation2 + $0x40] sm:$0xff]
    %v252 = vld [vmem:[#allocation2 + $0x48] sm:$0xff]
    %v253 = vld [vmem:[#allocation2 + $0x50] sm:$0xff]
    %v254 = vld [vmem:[#allocation2 + $0x58] sm:$0xff]
    %v255 = vld [vmem:[#allocation2 + $0x60] sm:$0xff]
    %v256 = vld [vmem:[#allocation2 + $0x68] sm:$0xff]
    %v257 = vld [vmem:[#allocation2 + $0x70] sm:$0xff]
    %v258 = vld [vmem:[#allocation2 + $0x78] sm:$0xff]
    %v259 = vld [vmem:[#allocation2 + $0x80] sm:$0xff]
    %v260 = vld [vmem:[#allocation2 + $0x88] sm:$0xff]
    %v261 = vld [vmem:[#allocation2 + $0x90] sm:$0xff]
    %v262 = vld [vmem:[#allocation2 + $0x98] sm:$0xff]
    %v263 = vld [vmem:[#allocation2 + $0xa0] sm:$0xff]
    %v264 = vld [vmem:[#allocation2 + $0xa8] sm:$0xff]
    %v265 = vld [vmem:[#allocation2 + $0xb0] sm:$0xff]
    %v266 = vld [vmem:[#allocation2 + $0xb8] sm:$0xff]
    %v267 = vld [vmem:[#allocation2 + $0xc0] sm:$0xff]
    %v268 = vld [vmem:[#allocation2 + $0xc8] sm:$0xff]
    %v269 = vld [vmem:[#allocation2 + $0xd0] sm:$0xff]
    %v270 = vld [vmem:[#allocation2 + $0xd8] sm:$0xff]
    %v271 = vld [vmem:[#allocation2 + $0xe0] sm:$0xff]
    %v272 = vld [vmem:[#allocation2 + $0xe8] sm:$0xff]
    %v273 = vld [vmem:[#allocation2 + $0xf0] sm:$0xff]
    %v274 = vld [vmem:[#allocation2 + $0xf8] sm:$0xff]
    %v275 = vld [vmem:[%s4] sm:$0xf]
    %v277 = vperm.slane %v275, 0
    %v278 = vperm.slane %v275, 1
    %v279 = vperm.slane %v275, 2
    %v280 = vperm.slane %v275, 3
    %v317 = vunpack.c.l.b16 %v243
    %v318 = vunpack.c.h.b16 %v243
    %v319 = vunpack.c.l.b16 %v244
    %v320 = vunpack.c.h.b16 %v244
    %v321 = vunpack.c.l.b16 %v245
    %v322 = vunpack.c.h.b16 %v245
    %v323 = vunpack.c.l.b16 %v246
    %v324 = vunpack.c.h.b16 %v246
    %v325 = vunpack.c.l.b16 %v247
    %v326 = vunpack.c.h.b16 %v247
    %v327 = vunpack.c.l.b16 %v248
    %v328 = vunpack.c.h.b16 %v248
    %v329 = vunpack.c.l.b16 %v249
    %v330 = vunpack.c.h.b16 %v249
    %v331 = vunpack.c.l.b16 %v250
    %v332 = vunpack.c.h.b16 %v250
    %v333 = vunpack.c.l.b16 %v251
    %v334 = vunpack.c.h.b16 %v251
    %v335 = vunpack.c.l.b16 %v252
    %v336 = vunpack.c.h.b16 %v252
    %v337 = vunpack.c.l.b16 %v253
    %v338 = vunpack.c.h.b16 %v253
    %v339 = vunpack.c.l.b16 %v254
    %v340 = vunpack.c.h.b16 %v254
    %v341 = vunpack.c.l.b16 %v255
    %v342 = vunpack.c.h.b16 %v255
    %v343 = vunpack.c.l.b16 %v256
    %v344 = vunpack.c.h.b16 %v256
    %v345 = vunpack.c.l.b16 %v257
    %v346 = vunpack.c.h.b16 %v257
    %v347 = vunpack.c.l.b16 %v258
    %v348 = vunpack.c.h.b16 %v258
    %v349 = vunpack.c.l.b16 %v259
    %v350 = vunpack.c.h.b16 %v259
    %v351 = vunpack.c.l.b16 %v260
    %v352 = vunpack.c.h.b16 %v260
    %v353 = vunpack.c.l.b16 %v261
    %v354 = vunpack.c.h.b16 %v261
    %v355 = vunpack.c.l.b16 %v262
    %v356 = vunpack.c.h.b16 %v262
    %v357 = vunpack.c.l.b16 %v263
    %v358 = vunpack.c.h.b16 %v263
    %v359 = vunpack.c.l.b16 %v264
    %v360 = vunpack.c.h.b16 %v264
    %v361 = vunpack.c.l.b16 %v265
    %v362 = vunpack.c.h.b16 %v265
    %v363 = vunpack.c.l.b16 %v266
    %v364 = vunpack.c.h.b16 %v266
    %v365 = vunpack.c.l.b16 %v267
    %v366 = vunpack.c.h.b16 %v267
    %v367 = vunpack.c.l.b16 %v268
    %v368 = vunpack.c.h.b16 %v268
    %v369 = vunpack.c.l.b16 %v269
    %v370 = vunpack.c.h.b16 %v269
    %v371 = vunpack.c.l.b16 %v270
    %v372 = vunpack.c.h.b16 %v270
    %v373 = vunpack.c.l.b16 %v271
    %v374 = vunpack.c.h.b16 %v271
    %v375 = vunpack.c.l.b16 %v272
    %v376 = vunpack.c.h.b16 %v272
    %v377 = vunpack.c.l.b16 %v273
    %v378 = vunpack.c.h.b16 %v273
    %v379 = vunpack.c.l.b16 %v274
    %v380 = vunpack.c.h.b16 %v274
    %v381 = vpack.c.b16 %v321, %v317
    %v382 = vpack.c.b16 %v322, %v318
    %v383 = vpack.c.b16 %v323, %v319
    %v384 = vpack.c.b16 %v324, %v320
    %v385 = vpack.c.b16 %v329, %v325
    %v386 = vpack.c.b16 %v330, %v326
    %v387 = vpack.c.b16 %v331, %v327
    %v388 = vpack.c.b16 %v332, %v328
    %v389 = vpack.c.b16 %v337, %v333
    %v390 = vpack.c.b16 %v338, %v334
    %v391 = vpack.c.b16 %v339, %v335
    %v392 = vpack.c.b16 %v340, %v336
    %v393 = vpack.c.b16 %v345, %v341
    %v394 = vpack.c.b16 %v346, %v342
    %v395 = vpack.c.b16 %v347, %v343
    %v396 = vpack.c.b16 %v348, %v344
    %v397 = vpack.c.b16 %v353, %v349
    %v398 = vpack.c.b16 %v354, %v350
    %v399 = vpack.c.b16 %v355, %v351
    %v400 = vpack.c.b16 %v356, %v352
    %v401 = vpack.c.b16 %v361, %v357
    %v402 = vpack.c.b16 %v362, %v358
    %v403 = vpack.c.b16 %v363, %v359
    %v404 = vpack.c.b16 %v364, %v360
    %v405 = vpack.c.b16 %v369, %v365
    %v406 = vpack.c.b16 %v370, %v366
    %v407 = vpack.c.b16 %v371, %v367
    %v408 = vpack.c.b16 %v372, %v368
    %v409 = vpack.c.b16 %v377, %v373
    %v410 = vpack.c.b16 %v378, %v374
    %v411 = vpack.c.b16 %v379, %v375
    %v412 = vpack.c.b16 %v380, %v376
    %445 = vmatpush.bf16.msra.mxu0 %v409
    %446 = vmatpush.bf16.msra.mxu0 %v405
    %447 = vmatpush.bf16.msra.mxu0 %v401
    %448 = vmatpush.bf16.msra.mxu0 %v397
    %449 = vmatpush.bf16.msra.mxu0 %v393
    %450 = vmatpush.bf16.msra.mxu0 %v389
    %451 = vmatpush.bf16.msra.mxu0 %v385
    %452 = vmatpush.bf16.msra.mxu0 %v381
    %453 = vmatmul.bf16.gmra.mxu0 %v235
    %v454 = vpop.f32.mrf.mxu0
    %v455 = vadd.f32 %v277, %v454
    %v456 = vpop.f32.mrf.mxu0
    %v457 = vadd.f32 %v277, %v456
    %458 = vmatmul.bf16.gmra.mxu0 %v236
    %v459 = vpop.f32.mrf.mxu0
    %v460 = vadd.f32 %v277, %v459
    %v461 = vpop.f32.mrf.mxu0
    %v462 = vadd.f32 %v277, %v461
    %463 = vmatmul.bf16.gmra.mxu0 %v237
    %v464 = vpop.f32.mrf.mxu0
    %v465 = vadd.f32 %v277, %v464
    %v466 = vpop.f32.mrf.mxu0
    %v467 = vadd.f32 %v277, %v466
    %468 = vmatmul.bf16.gmra.mxu0 %v238
    %v469 = vpop.f32.mrf.mxu0
    %v470 = vadd.f32 %v277, %v469
    %v471 = vpop.f32.mrf.mxu0
    %v472 = vadd.f32 %v277, %v471
    %473 = vmatmul.bf16.gmra.mxu0 %v239
    %v474 = vpop.f32.mrf.mxu0
    %v475 = vadd.f32 %v277, %v474
    %v476 = vpop.f32.mrf.mxu0
    %v477 = vadd.f32 %v277, %v476
    %478 = vmatmul.bf16.gmra.mxu0 %v240
    %v479 = vpop.f32.mrf.mxu0
    %v480 = vadd.f32 %v277, %v479
    %v481 = vpop.f32.mrf.mxu0
    %v482 = vadd.f32 %v277, %v481
    %483 = vmatmul.bf16.gmra.mxu0 %v241
    %v484 = vpop.f32.mrf.mxu0
    %v485 = vadd.f32 %v277, %v484
    %v486 = vpop.f32.mrf.mxu0
    %v487 = vadd.f32 %v277, %v486
    %488 = vmatmul.bf16.gmra.mxu0 %v242
    %v489 = vpop.f32.mrf.mxu0
    %v490 = vadd.f32 %v277, %v489
    %v491 = vpop.f32.mrf.mxu0
    %v492 = vadd.f32 %v277, %v491
    %493 = vdwg.mxu0
    %494 = vmatpush.bf16.msra.mxu0 %v410
    %495 = vmatpush.bf16.msra.mxu0 %v406
    %496 = vmatpush.bf16.msra.mxu0 %v402
    %497 = vmatpush.bf16.msra.mxu0 %v398
    %498 = vmatpush.bf16.msra.mxu0 %v394
    %499 = vmatpush.bf16.msra.mxu0 %v390
    %500 = vmatpush.bf16.msra.mxu0 %v386
    %501 = vmatpush.bf16.msra.mxu0 %v382
    %502 = vmatmul.bf16.gmra.mxu0 %v235
    %v503 = vpop.f32.mrf.mxu0
    %v504 = vadd.f32 %v278, %v503
    %v505 = vpop.f32.mrf.mxu0
    %v506 = vadd.f32 %v278, %v505
    %507 = vmatmul.bf16.gmra.mxu0 %v236
    %v508 = vpop.f32.mrf.mxu0
    %v509 = vadd.f32 %v278, %v508
    %v510 = vpop.f32.mrf.mxu0
    %v511 = vadd.f32 %v278, %v510
    %512 = vmatmul.bf16.gmra.mxu0 %v237
    %v513 = vpop.f32.mrf.mxu0
    %v514 = vadd.f32 %v278, %v513
    %v515 = vpop.f32.mrf.mxu0
    %v516 = vadd.f32 %v278, %v515
    %517 = vmatmul.bf16.gmra.mxu0 %v238
    %v518 = vpop.f32.mrf.mxu0
    %v519 = vadd.f32 %v278, %v518
    %v520 = vpop.f32.mrf.mxu0
    %v521 = vadd.f32 %v278, %v520
    %522 = vmatmul.bf16.gmra.mxu0 %v239
    %v523 = vpop.f32.mrf.mxu0
    %v524 = vadd.f32 %v278, %v523
    %v525 = vpop.f32.mrf.mxu0
    %v526 = vadd.f32 %v278, %v525
    %527 = vmatmul.bf16.gmra.mxu0 %v240
    %v528 = vpop.f32.mrf.mxu0
    %v529 = vadd.f32 %v278, %v528
    %v530 = vpop.f32.mrf.mxu0
    %v531 = vadd.f32 %v278, %v530
    %532 = vmatmul.bf16.gmra.mxu0 %v241
    %v533 = vpop.f32.mrf.mxu0
    %v534 = vadd.f32 %v278, %v533
    %v535 = vpop.f32.mrf.mxu0
    %v536 = vadd.f32 %v278, %v535
    %537 = vmatmul.bf16.gmra.mxu0 %v242
    %v538 = vpop.f32.mrf.mxu0
    %v539 = vadd.f32 %v278, %v538
    %v540 = vpop.f32.mrf.mxu0
    %v541 = vadd.f32 %v278, %v540
    %542 = vdwg.mxu0
    %543 = vmatpush.bf16.msra.mxu0 %v411
    %544 = vmatpush.bf16.msra.mxu0 %v407
    %545 = vmatpush.bf16.msra.mxu0 %v403
    %546 = vmatpush.bf16.msra.mxu0 %v399
    %547 = vmatpush.bf16.msra.mxu0 %v395
    %548 = vmatpush.bf16.msra.mxu0 %v391
    %549 = vmatpush.bf16.msra.mxu0 %v387
    %550 = vmatpush.bf16.msra.mxu0 %v383
    %551 = vmatmul.bf16.gmra.mxu0 %v235
    %v552 = vpop.f32.mrf.mxu0
    %v553 = vadd.f32 %v279, %v552
    %v554 = vpop.f32.mrf.mxu0
    %v555 = vadd.f32 %v279, %v554
    %556 = vmatmul.bf16.gmra.mxu0 %v236
    %v557 = vpop.f32.mrf.mxu0
    %v558 = vadd.f32 %v279, %v557
    %v559 = vpop.f32.mrf.mxu0
    %v560 = vadd.f32 %v279, %v559
    %561 = vmatmul.bf16.gmra.mxu0 %v237
    %v562 = vpop.f32.mrf.mxu0
    %v563 = vadd.f32 %v279, %v562
    %v564 = vpop.f32.mrf.mxu0
    %v565 = vadd.f32 %v279, %v564
    %566 = vmatmul.bf16.gmra.mxu0 %v238
    %v567 = vpop.f32.mrf.mxu0
    %v568 = vadd.f32 %v279, %v567
    %v569 = vpop.f32.mrf.mxu0
    %v570 = vadd.f32 %v279, %v569
    %571 = vmatmul.bf16.gmra.mxu0 %v239
    %v572 = vpop.f32.mrf.mxu0
    %v573 = vadd.f32 %v279, %v572
    %v574 = vpop.f32.mrf.mxu0
    %v575 = vadd.f32 %v279, %v574
    %576 = vmatmul.bf16.gmra.mxu0 %v240
    %v577 = vpop.f32.mrf.mxu0
    %v578 = vadd.f32 %v279, %v577
    %v579 = vpop.f32.mrf.mxu0
    %v580 = vadd.f32 %v279, %v579
    %581 = vmatmul.bf16.gmra.mxu0 %v241
    %v582 = vpop.f32.mrf.mxu0
    %v583 = vadd.f32 %v279, %v582
    %v584 = vpop.f32.mrf.mxu0
    %v585 = vadd.f32 %v279, %v584
    %586 = vmatmul.bf16.gmra.mxu0 %v242
    %v587 = vpop.f32.mrf.mxu0
    %v588 = vadd.f32 %v279, %v587
    %v589 = vpop.f32.mrf.mxu0
    %v590 = vadd.f32 %v279, %v589
    %591 = vdwg.mxu0
    %592 = vmatpush.bf16.msra.mxu0 %v412
    %593 = vmatpush.bf16.msra.mxu0 %v408
    %594 = vmatpush.bf16.msra.mxu0 %v404
    %595 = vmatpush.bf16.msra.mxu0 %v400
    %596 = vmatpush.bf16.msra.mxu0 %v396
    %597 = vmatpush.bf16.msra.mxu0 %v392
    %598 = vmatpush.bf16.msra.mxu0 %v388
    %599 = vmatpush.bf16.msra.mxu0 %v384
    %600 = vmatmul.bf16.gmra.mxu0 %v235
    %v601 = vpop.f32.mrf.mxu0
    %v602 = vadd.f32 %v280, %v601
    %v603 = vpop.f32.mrf.mxu0
    %v604 = vadd.f32 %v280, %v603
    %605 = vmatmul.bf16.gmra.mxu0 %v236
    %v606 = vpop.f32.mrf.mxu0
    %v607 = vadd.f32 %v280, %v606
    %v608 = vpop.f32.mrf.mxu0
    %v609 = vadd.f32 %v280, %v608
    %610 = vmatmul.bf16.gmra.mxu0 %v237
    %v611 = vpop.f32.mrf.mxu0
    %v612 = vadd.f32 %v280, %v611
    %v613 = vpop.f32.mrf.mxu0
    %v614 = vadd.f32 %v280, %v613
    %615 = vmatmul.bf16.gmra.mxu0 %v238
    %v616 = vpop.f32.mrf.mxu0
    %v617 = vadd.f32 %v280, %v616
    %v618 = vpop.f32.mrf.mxu0
    %v619 = vadd.f32 %v280, %v618
    %620 = vmatmul.bf16.gmra.mxu0 %v239
    %v621 = vpop.f32.mrf.mxu0
    %v622 = vadd.f32 %v280, %v621
    %v623 = vpop.f32.mrf.mxu0
    %v624 = vadd.f32 %v280, %v623
    %625 = vmatmul.bf16.gmra.mxu0 %v240
    %v626 = vpop.f32.mrf.mxu0
    %v627 = vadd.f32 %v280, %v626
    %v628 = vpop.f32.mrf.mxu0
    %v629 = vadd.f32 %v280, %v628
    %630 = vmatmul.bf16.gmra.mxu0 %v241
    %v631 = vpop.f32.mrf.mxu0
    %v632 = vadd.f32 %v280, %v631
    %v633 = vpop.f32.mrf.mxu0
    %v634 = vadd.f32 %v280, %v633
    %635 = vmatmul.bf16.gmra.mxu0 %v242
    %v636 = vpop.f32.mrf.mxu0
    %v637 = vadd.f32 %v280, %v636
    %v638 = vpop.f32.mrf.mxu0
    %v639 = vadd.f32 %v280, %v638
    %640 = vdwg.mxu0
    %v641 = vmax.f32 %v455, 0.0
    %v642 = vmax.f32 %v504, 0.0
    %v643 = vmax.f32 %v553, 0.0
    %v644 = vmax.f32 %v602, 0.0
    %v645 = vmax.f32 %v457, 0.0
    %v646 = vmax.f32 %v506, 0.0
    %v647 = vmax.f32 %v555, 0.0
    %v648 = vmax.f32 %v604, 0.0
    %v649 = vmax.f32 %v460, 0.0
    %v650 = vmax.f32 %v509, 0.0
    %v651 = vmax.f32 %v558, 0.0
    %v652 = vmax.f32 %v607, 0.0
    %v653 = vmax.f32 %v462, 0.0
    %v654 = vmax.f32 %v511, 0.0
    %v655 = vmax.f32 %v560, 0.0
    %v656 = vmax.f32 %v609, 0.0
    %v657 = vmax.f32 %v465, 0.0
    %v658 = vmax.f32 %v514, 0.0
    %v659 = vmax.f32 %v563, 0.0
    %v660 = vmax.f32 %v612, 0.0
    %v661 = vmax.f32 %v467, 0.0
    %v662 = vmax.f32 %v516, 0.0
    %v663 = vmax.f32 %v565, 0.0
    %v664 = vmax.f32 %v614, 0.0
    %v665 = vmax.f32 %v470, 0.0
    %v666 = vmax.f32 %v519, 0.0
    %v667 = vmax.f32 %v568, 0.0
    %v668 = vmax.f32 %v617, 0.0
    %v669 = vmax.f32 %v472, 0.0
    %v670 = vmax.f32 %v521, 0.0
    %v671 = vmax.f32 %v570, 0.0
    %v672 = vmax.f32 %v619, 0.0
    %v673 = vmax.f32 %v475, 0.0
    %v674 = vmax.f32 %v524, 0.0
    %v675 = vmax.f32 %v573, 0.0
    %v676 = vmax.f32 %v622, 0.0
    %v677 = vmax.f32 %v477, 0.0
    %v678 = vmax.f32 %v526, 0.0
    %v679 = vmax.f32 %v575, 0.0
    %v680 = vmax.f32 %v624, 0.0
    %v681 = vmax.f32 %v480, 0.0
    %v682 = vmax.f32 %v529, 0.0
    %v683 = vmax.f32 %v578, 0.0
    %v684 = vmax.f32 %v627, 0.0
    %v685 = vmax.f32 %v482, 0.0
    %v686 = vmax.f32 %v531, 0.0
    %v687 = vmax.f32 %v580, 0.0
    %v688 = vmax.f32 %v629, 0.0
    %v689 = vmax.f32 %v485, 0.0
    %v690 = vmax.f32 %v534, 0.0
    %v691 = vmax.f32 %v583, 0.0
    %v692 = vmax.f32 %v632, 0.0
    %v693 = vmax.f32 %v487, 0.0
    %v694 = vmax.f32 %v536, 0.0
    %v695 = vmax.f32 %v585, 0.0
    %v696 = vmax.f32 %v634, 0.0
    %v697 = vmax.f32 %v490, 0.0
    %v698 = vmax.f32 %v539, 0.0
    %v699 = vmax.f32 %v588, 0.0
    %v700 = vmax.f32 %v637, 0.0
    %v701 = vmax.f32 %v492, 0.0
    %v702 = vmax.f32 %v541, 0.0
    %v703 = vmax.f32 %v590, 0.0
    %v704 = vmax.f32 %v639, 0.0
    %v705 = vpack.c.bf16 %v645, %v641
    %v706 = vpack.c.bf16 %v646, %v642
    %v707 = vpack.c.bf16 %v647, %v643
    %v708 = vpack.c.bf16 %v648, %v644
    %v709 = vpack.c.bf16 %v653, %v649
    %v710 = vpack.c.bf16 %v654, %v650
    %v711 = vpack.c.bf16 %v655, %v651
    %v712 = vpack.c.bf16 %v656, %v652
    %v713 = vpack.c.bf16 %v661, %v657
    %v714 = vpack.c.bf16 %v662, %v658
    %v715 = vpack.c.bf16 %v663, %v659
    %v716 = vpack.c.bf16 %v664, %v660
    %v717 = vpack.c.bf16 %v669, %v665
    %v718 = vpack.c.bf16 %v670, %v666
    %v719 = vpack.c.bf16 %v671, %v667
    %v720 = vpack.c.bf16 %v672, %v668
    %v721 = vpack.c.bf16 %v677, %v673
    %v722 = vpack.c.bf16 %v678, %v674
    %v723 = vpack.c.bf16 %v679, %v675
    %v724 = vpack.c.bf16 %v680, %v676
    %v725 = vpack.c.bf16 %v685, %v681
    %v726 = vpack.c.bf16 %v686, %v682
    %v727 = vpack.c.bf16 %v687, %v683
    %v728 = vpack.c.bf16 %v688, %v684
    %v729 = vpack.c.bf16 %v693, %v689
    %v730 = vpack.c.bf16 %v694, %v690
    %v731 = vpack.c.bf16 %v695, %v691
    %v732 = vpack.c.bf16 %v696, %v692
    %v733 = vpack.c.bf16 %v701, %v697
    %v734 = vpack.c.bf16 %v702, %v698
    %v735 = vpack.c.bf16 %v703, %v699
    %v736 = vpack.c.bf16 %v704, %v700
    %v737 = vld [vmem:[#allocation5] sm:$0xf]
    %v738 = vld [vmem:[#allocation5 + $0x4] sm:$0xf]
    %v739 = vld [vmem:[#allocation5 + $0x8] sm:$0xf]
    %v740 = vld [vmem:[#allocation5 + $0xc] sm:$0xf]
    %v741 = vld [vmem:[#allocation5 + $0x10] sm:$0xf]
    %v742 = vld [vmem:[#allocation5 + $0x14] sm:$0xf]
    %v743 = vld [vmem:[#allocation5 + $0x18] sm:$0xf]
    %v744 = vld [vmem:[#allocation5 + $0x1c] sm:$0xf]
    %v745 = vld [vmem:[#allocation5 + $0x20] sm:$0xf]
    %v746 = vld [vmem:[#allocation5 + $0x24] sm:$0xf]
    %v747 = vld [vmem:[#allocation5 + $0x28] sm:$0xf]
    %v748 = vld [vmem:[#allocation5 + $0x2c] sm:$0xf]
    %v749 = vld [vmem:[#allocation5 + $0x30] sm:$0xf]
    %v750 = vld [vmem:[#allocation5 + $0x34] sm:$0xf]
    %v751 = vld [vmem:[#allocation5 + $0x38] sm:$0xf]
    %v752 = vld [vmem:[#allocation5 + $0x3c] sm:$0xf]
    %v753 = vld [vmem:[#allocation5 + $0x40] sm:$0xf]
    %v754 = vld [vmem:[#allocation5 + $0x44] sm:$0xf]
    %v755 = vld [vmem:[#allocation5 + $0x48] sm:$0xf]
    %v756 = vld [vmem:[#allocation5 + $0x4c] sm:$0xf]
    %v757 = vld [vmem:[#allocation5 + $0x50] sm:$0xf]
    %v758 = vld [vmem:[#allocation5 + $0x54] sm:$0xf]
    %v759 = vld [vmem:[#allocation5 + $0x58] sm:$0xf]
    %v760 = vld [vmem:[#allocation5 + $0x5c] sm:$0xf]
    %v761 = vld [vmem:[#allocation5 + $0x60] sm:$0xf]
    %v762 = vld [vmem:[#allocation5 + $0x64] sm:$0xf]
    %v763 = vld [vmem:[#allocation5 + $0x68] sm:$0xf]
    %v764 = vld [vmem:[#allocation5 + $0x6c] sm:$0xf]
    %v765 = vld [vmem:[#allocation5 + $0x70] sm:$0xf]
    %v766 = vld [vmem:[#allocation5 + $0x74] sm:$0xf]
    %v767 = vld [vmem:[#allocation5 + $0x78] sm:$0xf]
    %v768 = vld [vmem:[#allocation5 + $0x7c] sm:$0xf]
    %v769 = vld [vmem:[#allocation5 + $0x80] sm:$0xf]
    %v770 = vld [vmem:[#allocation5 + $0x84] sm:$0xf]
    %v771 = vld [vmem:[#allocation5 + $0x88] sm:$0xf]
    %v772 = vld [vmem:[#allocation5 + $0x8c] sm:$0xf]
    %v773 = vld [vmem:[#allocation5 + $0x90] sm:$0xf]
    %v774 = vld [vmem:[#allocation5 + $0x94] sm:$0xf]
    %v775 = vld [vmem:[#allocation5 + $0x98] sm:$0xf]
    %v776 = vld [vmem:[#allocation5 + $0x9c] sm:$0xf]
    %v777 = vld [vmem:[#allocation5 + $0xa0] sm:$0xf]
    %v778 = vld [vmem:[#allocation5 + $0xa4] sm:$0xf]
    %v779 = vld [vmem:[#allocation5 + $0xa8] sm:$0xf]
    %v780 = vld [vmem:[#allocation5 + $0xac] sm:$0xf]
    %v781 = vld [vmem:[#allocation5 + $0xb0] sm:$0xf]
    %v782 = vld [vmem:[#allocation5 + $0xb4] sm:$0xf]
    %v783 = vld [vmem:[#allocation5 + $0xb8] sm:$0xf]
    %v784 = vld [vmem:[#allocation5 + $0xbc] sm:$0xf]
    %v785 = vld [vmem:[#allocation5 + $0xc0] sm:$0xf]
    %v786 = vld [vmem:[#allocation5 + $0xc4] sm:$0xf]
    %v787 = vld [vmem:[#allocation5 + $0xc8] sm:$0xf]
    %v788 = vld [vmem:[#allocation5 + $0xcc] sm:$0xf]
    %v789 = vld [vmem:[#allocation5 + $0xd0] sm:$0xf]
    %v790 = vld [vmem:[#allocation5 + $0xd4] sm:$0xf]
    %v791 = vld [vmem:[#allocation5 + $0xd8] sm:$0xf]
    %v792 = vld [vmem:[#allocation5 + $0xdc] sm:$0xf]
    %v793 = vld [vmem:[#allocation5 + $0xe0] sm:$0xf]
    %v794 = vld [vmem:[#allocation5 + $0xe4] sm:$0xf]
    %v795 = vld [vmem:[#allocation5 + $0xe8] sm:$0xf]
    %v796 = vld [vmem:[#allocation5 + $0xec] sm:$0xf]
    %v797 = vld [vmem:[#allocation5 + $0xf0] sm:$0xf]
    %v798 = vld [vmem:[#allocation5 + $0xf4] sm:$0xf]
    %v799 = vld [vmem:[#allocation5 + $0xf8] sm:$0xf]
    %v800 = vld [vmem:[#allocation5 + $0xfc] sm:$0xf]
    %v801 = vld [vmem:[%s6] sm:$0x1]
    %v803 = vperm.slane %v801, 0
    %v869 = vunpack.c.l.b16 %v737
    %v870 = vunpack.c.l.b16 %v738
    %v871 = vunpack.c.l.b16 %v739
    %v872 = vunpack.c.l.b16 %v740
    %v873 = vunpack.c.l.b16 %v741
    %v874 = vunpack.c.l.b16 %v742
    %v875 = vunpack.c.l.b16 %v743
    %v876 = vunpack.c.l.b16 %v744
    %v877 = vunpack.c.l.b16 %v745
    %v878 = vunpack.c.l.b16 %v746
    %v879 = vunpack.c.l.b16 %v747
    %v880 = vunpack.c.l.b16 %v748
    %v881 = vunpack.c.l.b16 %v749
    %v882 = vunpack.c.l.b16 %v750
    %v883 = vunpack.c.l.b16 %v751
    %v884 = vunpack.c.l.b16 %v752
    %v885 = vunpack.c.l.b16 %v753
    %v886 = vunpack.c.l.b16 %v754
    %v887 = vunpack.c.l.b16 %v755
    %v888 = vunpack.c.l.b16 %v756
    %v889 = vunpack.c.l.b16 %v757
    %v890 = vunpack.c.l.b16 %v758
    %v891 = vunpack.c.l.b16 %v759
    %v892 = vunpack.c.l.b16 %v760
    %v893 = vunpack.c.l.b16 %v761
    %v894 = vunpack.c.l.b16 %v762
    %v895 = vunpack.c.l.b16 %v763
    %v896 = vunpack.c.l.b16 %v764
    %v897 = vunpack.c.l.b16 %v765
    %v898 = vunpack.c.l.b16 %v766
    %v899 = vunpack.c.l.b16 %v767
    %v900 = vunpack.c.l.b16 %v768
    %v901 = vunpack.c.l.b16 %v769
    %v902 = vunpack.c.l.b16 %v770
    %v903 = vunpack.c.l.b16 %v771
    %v904 = vunpack.c.l.b16 %v772
    %v905 = vunpack.c.l.b16 %v773
    %v906 = vunpack.c.l.b16 %v774
    %v907 = vunpack.c.l.b16 %v775
    %v908 = vunpack.c.l.b16 %v776
    %v909 = vunpack.c.l.b16 %v777
    %v910 = vunpack.c.l.b16 %v778
    %v911 = vunpack.c.l.b16 %v779
    %v912 = vunpack.c.l.b16 %v780
    %v913 = vunpack.c.l.b16 %v781
    %v914 = vunpack.c.l.b16 %v782
    %v915 = vunpack.c.l.b16 %v783
    %v916 = vunpack.c.l.b16 %v784
    %v917 = vunpack.c.l.b16 %v785
    %v918 = vunpack.c.l.b16 %v786
    %v919 = vunpack.c.l.b16 %v787
    %v920 = vunpack.c.l.b16 %v788
    %v921 = vunpack.c.l.b16 %v789
    %v922 = vunpack.c.l.b16 %v790
    %v923 = vunpack.c.l.b16 %v791
    %v924 = vunpack.c.l.b16 %v792
    %v925 = vunpack.c.l.b16 %v793
    %v926 = vunpack.c.l.b16 %v794
    %v927 = vunpack.c.l.b16 %v795
    %v928 = vunpack.c.l.b16 %v796
    %v929 = vunpack.c.l.b16 %v797
    %v930 = vunpack.c.l.b16 %v798
    %v931 = vunpack.c.l.b16 %v799
    %v932 = vunpack.c.l.b16 %v800
    %v933 = vpack.c.b16 %v870, %v869
    %v934 = vpack.c.b16 %v872, %v871
    %v935 = vpack.c.b16 %v874, %v873
    %v936 = vpack.c.b16 %v876, %v875
    %v937 = vpack.c.b16 %v878, %v877
    %v938 = vpack.c.b16 %v880, %v879
    %v939 = vpack.c.b16 %v882, %v881
    %v940 = vpack.c.b16 %v884, %v883
    %v941 = vpack.c.b16 %v886, %v885
    %v942 = vpack.c.b16 %v888, %v887
    %v943 = vpack.c.b16 %v890, %v889
    %v944 = vpack.c.b16 %v892, %v891
    %v945 = vpack.c.b16 %v894, %v893
    %v946 = vpack.c.b16 %v896, %v895
    %v947 = vpack.c.b16 %v898, %v897
    %v948 = vpack.c.b16 %v900, %v899
    %v949 = vpack.c.b16 %v902, %v901
    %v950 = vpack.c.b16 %v904, %v903
    %v951 = vpack.c.b16 %v906, %v905
    %v952 = vpack.c.b16 %v908, %v907
    %v953 = vpack.c.b16 %v910, %v909
    %v954 = vpack.c.b16 %v912, %v911
    %v955 = vpack.c.b16 %v914, %v913
    %v956 = vpack.c.b16 %v916, %v915
    %v957 = vpack.c.b16 %v918, %v917
    %v958 = vpack.c.b16 %v920, %v919
    %v959 = vpack.c.b16 %v922, %v921
    %v960 = vpack.c.b16 %v924, %v923
    %v961 = vpack.c.b16 %v926, %v925
    %v962 = vpack.c.b16 %v928, %v927
    %v963 = vpack.c.b16 %v930, %v929
    %v964 = vpack.c.b16 %v932, %v931
    %997 = vmatpush.bf16.msra.mxu0 %v940
    %998 = vmatpush.bf16.msra.mxu0 %v939
    %999 = vmatpush.bf16.msra.mxu0 %v938
    %1000 = vmatpush.bf16.msra.mxu0 %v937
    %1001 = vmatpush.bf16.msra.mxu0 %v936
    %1002 = vmatpush.bf16.msra.mxu0 %v935
    %1003 = vmatpush.bf16.msra.mxu0 %v934
    %1004 = vmatpush.bf16.msra.mxu0 %v933
    %1005 = vmatmul.bf16.gmra.mxu0 %v705
    %v1006 = vpop.f32.mrf.mxu0
    %v1007 = vadd.f32 %v803, %v1006
    %v1008 = vpop.f32.mrf.mxu0
    %v1009 = vadd.f32 %v803, %v1008
    %1010 = vmatmul.bf16.gmra.mxu0 %v709
    %v1011 = vpop.f32.mrf.mxu0
    %v1012 = vadd.f32 %v803, %v1011
    %v1013 = vpop.f32.mrf.mxu0
    %v1014 = vadd.f32 %v803, %v1013
    %1015 = vmatmul.bf16.gmra.mxu0 %v713
    %v1016 = vpop.f32.mrf.mxu0
    %v1017 = vadd.f32 %v803, %v1016
    %v1018 = vpop.f32.mrf.mxu0
    %v1019 = vadd.f32 %v803, %v1018
    %1020 = vmatmul.bf16.gmra.mxu0 %v717
    %v1021 = vpop.f32.mrf.mxu0
    %v1022 = vadd.f32 %v803, %v1021
    %v1023 = vpop.f32.mrf.mxu0
    %v1024 = vadd.f32 %v803, %v1023
    %1025 = vmatmul.bf16.gmra.mxu0 %v721
    %v1026 = vpop.f32.mrf.mxu0
    %v1027 = vadd.f32 %v803, %v1026
    %v1028 = vpop.f32.mrf.mxu0
    %v1029 = vadd.f32 %v803, %v1028
    %1030 = vmatmul.bf16.gmra.mxu0 %v725
    %v1031 = vpop.f32.mrf.mxu0
    %v1032 = vadd.f32 %v803, %v1031
    %v1033 = vpop.f32.mrf.mxu0
    %v1034 = vadd.f32 %v803, %v1033
    %1035 = vmatmul.bf16.gmra.mxu0 %v729
    %v1036 = vpop.f32.mrf.mxu0
    %v1037 = vadd.f32 %v803, %v1036
    %v1038 = vpop.f32.mrf.mxu0
    %v1039 = vadd.f32 %v803, %v1038
    %1040 = vmatmul.bf16.gmra.mxu0 %v733
    %v1041 = vpop.f32.mrf.mxu0
    %v1042 = vadd.f32 %v803, %v1041
    %v1043 = vpop.f32.mrf.mxu0
    %v1044 = vadd.f32 %v803, %v1043
    %1045 = vdwg.mxu0
    %1046 = vmatpush.bf16.msra.mxu0 %v948
    %1047 = vmatpush.bf16.msra.mxu0 %v947
    %1048 = vmatpush.bf16.msra.mxu0 %v946
    %1049 = vmatpush.bf16.msra.mxu0 %v945
    %1050 = vmatpush.bf16.msra.mxu0 %v944
    %1051 = vmatpush.bf16.msra.mxu0 %v943
    %1052 = vmatpush.bf16.msra.mxu0 %v942
    %1053 = vmatpush.bf16.msra.mxu0 %v941
    %1054 = vmatmul.bf16.gmra.mxu0 %v706
    %v1055 = vpop.f32.mrf.mxu0
    %v1056 = vadd.f32 %v1007, %v1055
    %v1057 = vpop.f32.mrf.mxu0
    %v1058 = vadd.f32 %v1009, %v1057
    %1059 = vmatmul.bf16.gmra.mxu0 %v710
    %v1060 = vpop.f32.mrf.mxu0
    %v1061 = vadd.f32 %v1012, %v1060
    %v1062 = vpop.f32.mrf.mxu0
    %v1063 = vadd.f32 %v1014, %v1062
    %1064 = vmatmul.bf16.gmra.mxu0 %v714
    %v1065 = vpop.f32.mrf.mxu0
    %v1066 = vadd.f32 %v1017, %v1065
    %v1067 = vpop.f32.mrf.mxu0
    %v1068 = vadd.f32 %v1019, %v1067
    %1069 = vmatmul.bf16.gmra.mxu0 %v718
    %v1070 = vpop.f32.mrf.mxu0
    %v1071 = vadd.f32 %v1022, %v1070
    %v1072 = vpop.f32.mrf.mxu0
    %v1073 = vadd.f32 %v1024, %v1072
    %1074 = vmatmul.bf16.gmra.mxu0 %v722
    %v1075 = vpop.f32.mrf.mxu0
    %v1076 = vadd.f32 %v1027, %v1075
    %v1077 = vpop.f32.mrf.mxu0
    %v1078 = vadd.f32 %v1029, %v1077
    %1079 = vmatmul.bf16.gmra.mxu0 %v726
    %v1080 = vpop.f32.mrf.mxu0
    %v1081 = vadd.f32 %v1032, %v1080
    %v1082 = vpop.f32.mrf.mxu0
    %v1083 = vadd.f32 %v1034, %v1082
    %1084 = vmatmul.bf16.gmra.mxu0 %v730
    %v1085 = vpop.f32.mrf.mxu0
    %v1086 = vadd.f32 %v1037, %v1085
    %v1087 = vpop.f32.mrf.mxu0
    %v1088 = vadd.f32 %v1039, %v1087
    %1089 = vmatmul.bf16.gmra.mxu0 %v734
    %v1090 = vpop.f32.mrf.mxu0
    %v1091 = vadd.f32 %v1042, %v1090
    %v1092 = vpop.f32.mrf.mxu0
    %v1093 = vadd.f32 %v1044, %v1092
    %1094 = vdwg.mxu0
    %1095 = vmatpush.bf16.msra.mxu0 %v956
    %1096 = vmatpush.bf16.msra.mxu0 %v955
    %1097 = vmatpush.bf16.msra.mxu0 %v954
    %1098 = vmatpush.bf16.msra.mxu0 %v953
    %1099 = vmatpush.bf16.msra.mxu0 %v952
    %1100 = vmatpush.bf16.msra.mxu0 %v951
    %1101 = vmatpush.bf16.msra.mxu0 %v950
    %1102 = vmatpush.bf16.msra.mxu0 %v949
    %1103 = vmatmul.bf16.gmra.mxu0 %v707
    %v1104 = vpop.f32.mrf.mxu0
    %v1105 = vadd.f32 %v1056, %v1104
    %v1106 = vpop.f32.mrf.mxu0
    %v1107 = vadd.f32 %v1058, %v1106
    %1108 = vmatmul.bf16.gmra.mxu0 %v711
    %v1109 = vpop.f32.mrf.mxu0
    %v1110 = vadd.f32 %v1061, %v1109
    %v1111 = vpop.f32.mrf.mxu0
    %v1112 = vadd.f32 %v1063, %v1111
    %1113 = vmatmul.bf16.gmra.mxu0 %v715
    %v1114 = vpop.f32.mrf.mxu0
    %v1115 = vadd.f32 %v1066, %v1114
    %v1116 = vpop.f32.mrf.mxu0
    %v1117 = vadd.f32 %v1068, %v1116
    %1118 = vmatmul.bf16.gmra.mxu0 %v719
    %v1119 = vpop.f32.mrf.mxu0
    %v1120 = vadd.f32 %v1071, %v1119
    %v1121 = vpop.f32.mrf.mxu0
    %v1122 = vadd.f32 %v1073, %v1121
    %1123 = vmatmul.bf16.gmra.mxu0 %v723
    %v1124 = vpop.f32.mrf.mxu0
    %v1125 = vadd.f32 %v1076, %v1124
    %v1126 = vpop.f32.mrf.mxu0
    %v1127 = vadd.f32 %v1078, %v1126
    %1128 = vmatmul.bf16.gmra.mxu0 %v727
    %v1129 = vpop.f32.mrf.mxu0
    %v1130 = vadd.f32 %v1081, %v1129
    %v1131 = vpop.f32.mrf.mxu0
    %v1132 = vadd.f32 %v1083, %v1131
    %1133 = vmatmul.bf16.gmra.mxu0 %v731
    %v1134 = vpop.f32.mrf.mxu0
    %v1135 = vadd.f32 %v1086, %v1134
    %v1136 = vpop.f32.mrf.mxu0
    %v1137 = vadd.f32 %v1088, %v1136
    %1138 = vmatmul.bf16.gmra.mxu0 %v735
    %v1139 = vpop.f32.mrf.mxu0
    %v1140 = vadd.f32 %v1091, %v1139
    %v1141 = vpop.f32.mrf.mxu0
    %v1142 = vadd.f32 %v1093, %v1141
    %1143 = vdwg.mxu0
    %1144 = vmatpush.bf16.msra.mxu0 %v964
    %1145 = vmatpush.bf16.msra.mxu0 %v963
    %1146 = vmatpush.bf16.msra.mxu0 %v962
    %1147 = vmatpush.bf16.msra.mxu0 %v961
    %1148 = vmatpush.bf16.msra.mxu0 %v960
    %1149 = vmatpush.bf16.msra.mxu0 %v959
    %1150 = vmatpush.bf16.msra.mxu0 %v958
    %1151 = vmatpush.bf16.msra.mxu0 %v957
    %1152 = vmatmul.bf16.gmra.mxu0 %v708
    %v1153 = vpop.f32.mrf.mxu0
    %v1154 = vadd.f32 %v1105, %v1153
    %v1155 = vpop.f32.mrf.mxu0
    %v1156 = vadd.f32 %v1107, %v1155
    %1157 = vmatmul.bf16.gmra.mxu0 %v712
    %v1158 = vpop.f32.mrf.mxu0
    %v1159 = vadd.f32 %v1110, %v1158
    %v1160 = vpop.f32.mrf.mxu0
    %v1161 = vadd.f32 %v1112, %v1160
    %1162 = vmatmul.bf16.gmra.mxu0 %v716
    %v1163 = vpop.f32.mrf.mxu0
    %v1164 = vadd.f32 %v1115, %v1163
    %v1165 = vpop.f32.mrf.mxu0
    %v1166 = vadd.f32 %v1117, %v1165
    %1167 = vmatmul.bf16.gmra.mxu0 %v720
    %v1168 = vpop.f32.mrf.mxu0
    %v1169 = vadd.f32 %v1120, %v1168
    %v1170 = vpop.f32.mrf.mxu0
    %v1171 = vadd.f32 %v1122, %v1170
    %1172 = vmatmul.bf16.gmra.mxu0 %v724
    %v1173 = vpop.f32.mrf.mxu0
    %v1174 = vadd.f32 %v1125, %v1173
    %v1175 = vpop.f32.mrf.mxu0
    %v1176 = vadd.f32 %v1127, %v1175
    %1177 = vmatmul.bf16.gmra.mxu0 %v728
    %v1178 = vpop.f32.mrf.mxu0
    %v1179 = vadd.f32 %v1130, %v1178
    %v1180 = vpop.f32.mrf.mxu0
    %v1181 = vadd.f32 %v1132, %v1180
    %1182 = vmatmul.bf16.gmra.mxu0 %v732
    %v1183 = vpop.f32.mrf.mxu0
    %v1184 = vadd.f32 %v1135, %v1183
    %v1185 = vpop.f32.mrf.mxu0
    %v1186 = vadd.f32 %v1137, %v1185
    %1187 = vmatmul.bf16.gmra.mxu0 %v736
    %v1188 = vpop.f32.mrf.mxu0
    %v1189 = vadd.f32 %v1140, %v1188
    %v1190 = vpop.f32.mrf.mxu0
    %v1191 = vadd.f32 %v1142, %v1190
    %1192 = vdwg.mxu0
    %v1193 = vmax.f32 %v1154, 0.0
    %v1194 = vmax.f32 %v1156, 0.0
    %v1195 = vmax.f32 %v1159, 0.0
    %v1196 = vmax.f32 %v1161, 0.0
    %v1197 = vmax.f32 %v1164, 0.0
    %v1198 = vmax.f32 %v1166, 0.0
    %v1199 = vmax.f32 %v1169, 0.0
    %v1200 = vmax.f32 %v1171, 0.0
    %v1201 = vmax.f32 %v1174, 0.0
    %v1202 = vmax.f32 %v1176, 0.0
    %v1203 = vmax.f32 %v1179, 0.0
    %v1204 = vmax.f32 %v1181, 0.0
    %v1205 = vmax.f32 %v1184, 0.0
    %v1206 = vmax.f32 %v1186, 0.0
    %v1207 = vmax.f32 %v1189, 0.0
    %v1208 = vmax.f32 %v1191, 0.0
    %v1209 = vpack.c.bf16 %v1194, %v1193
    %v1210 = vpack.c.bf16 %v1196, %v1195
    %v1211 = vpack.c.bf16 %v1198, %v1197
    %v1212 = vpack.c.bf16 %v1200, %v1199
    %v1213 = vpack.c.bf16 %v1202, %v1201
    %v1214 = vpack.c.bf16 %v1204, %v1203
    %v1215 = vpack.c.bf16 %v1206, %v1205
    %v1216 = vpack.c.bf16 %v1208, %v1207
    %v1217 = vld [vmem:[%s7] sm:$0xf]
    %v1218 = vld [vmem:[%s7 + $0x4] sm:$0xf]
    %v1219 = vld [vmem:[%s7 + $0x8] sm:$0xf]
    %v1220 = vld [vmem:[%s7 + $0xc] sm:$0xf]
    %v1221 = vld [vmem:[%s7 + $0x10] sm:$0xf]
    %v1222 = vld [vmem:[%s7 + $0x14] sm:$0xf]
    %v1223 = vld [vmem:[%s7 + $0x18] sm:$0xf]
    %v1224 = vld [vmem:[%s7 + $0x1c] sm:$0xf]
    %v1225 = vld [vmem:[%s7 + $0x20] sm:$0xf]
    %v1226 = vld [vmem:[%s7 + $0x24] sm:$0xf]
    %v1227 = vld [vmem:[%s7 + $0x28] sm:$0xf]
    %v1228 = vld [vmem:[%s7 + $0x2c] sm:$0xf]
    %v1229 = vld [vmem:[%s7 + $0x30] sm:$0xf]
    %v1230 = vld [vmem:[%s7 + $0x34] sm:$0xf]
    %v1231 = vld [vmem:[%s7 + $0x38] sm:$0xf]
    %v1232 = vld [vmem:[%s7 + $0x3c] sm:$0xf]
    %v1233 = vld [vmem:[%s8] sm:$0x1]
    %v1235 = vperm.slane %v1233, 0
    %v1253 = vunpack.c.l.b16 %v1217
    %v1254 = vunpack.c.l.b16 %v1218
    %v1255 = vunpack.c.l.b16 %v1219
    %v1256 = vunpack.c.l.b16 %v1220
    %v1257 = vunpack.c.l.b16 %v1221
    %v1258 = vunpack.c.l.b16 %v1222
    %v1259 = vunpack.c.l.b16 %v1223
    %v1260 = vunpack.c.l.b16 %v1224
    %v1261 = vunpack.c.l.b16 %v1225
    %v1262 = vunpack.c.l.b16 %v1226
    %v1263 = vunpack.c.l.b16 %v1227
    %v1264 = vunpack.c.l.b16 %v1228
    %v1265 = vunpack.c.l.b16 %v1229
    %v1266 = vunpack.c.l.b16 %v1230
    %v1267 = vunpack.c.l.b16 %v1231
    %v1268 = vunpack.c.l.b16 %v1232
    %v1269 = vpack.c.b16 %v1254, %v1253
    %v1270 = vpack.c.b16 %v1256, %v1255
    %v1271 = vpack.c.b16 %v1258, %v1257
    %v1272 = vpack.c.b16 %v1260, %v1259
    %v1273 = vpack.c.b16 %v1262, %v1261
    %v1274 = vpack.c.b16 %v1264, %v1263
    %v1275 = vpack.c.b16 %v1266, %v1265
    %v1276 = vpack.c.b16 %v1268, %v1267
    %1285 = vmatpush.bf16.msra.mxu0 %v1276
    %1286 = vmatpush.bf16.msra.mxu0 %v1275
    %1287 = vmatpush.bf16.msra.mxu0 %v1274
    %1288 = vmatpush.bf16.msra.mxu0 %v1273
    %1289 = vmatpush.bf16.msra.mxu0 %v1272
    %1290 = vmatpush.bf16.msra.mxu0 %v1271
    %1291 = vmatpush.bf16.msra.mxu0 %v1270
    %1292 = vmatpush.bf16.msra.mxu0 %v1269
    %1293 = vmatmul.bf16.gmra.mxu0 %v1209
    %v1294 = vpop.f32.mrf.mxu0
    %v1295 = vadd.f32 %v1235, %v1294
    %v1296 = vpop.f32.mrf.mxu0
    %v1297 = vadd.f32 %v1235, %v1296
    %1298 = vmatmul.bf16.gmra.mxu0 %v1210
    %v1299 = vpop.f32.mrf.mxu0
    %v1300 = vadd.f32 %v1235, %v1299
    %v1301 = vpop.f32.mrf.mxu0
    %v1302 = vadd.f32 %v1235, %v1301
    %1303 = vmatmul.bf16.gmra.mxu0 %v1211
    %v1304 = vpop.f32.mrf.mxu0
    %v1305 = vadd.f32 %v1235, %v1304
    %v1306 = vpop.f32.mrf.mxu0
    %v1307 = vadd.f32 %v1235, %v1306
    %1308 = vmatmul.bf16.gmra.mxu0 %v1212
    %v1309 = vpop.f32.mrf.mxu0
    %v1310 = vadd.f32 %v1235, %v1309
    %v1311 = vpop.f32.mrf.mxu0
    %v1312 = vadd.f32 %v1235, %v1311
    %1313 = vmatmul.bf16.gmra.mxu0 %v1213
    %v1314 = vpop.f32.mrf.mxu0
    %v1315 = vadd.f32 %v1235, %v1314
    %v1316 = vpop.f32.mrf.mxu0
    %v1317 = vadd.f32 %v1235, %v1316
    %1318 = vmatmul.bf16.gmra.mxu0 %v1214
    %v1319 = vpop.f32.mrf.mxu0
    %v1320 = vadd.f32 %v1235, %v1319
    %v1321 = vpop.f32.mrf.mxu0
    %v1322 = vadd.f32 %v1235, %v1321
    %1323 = vmatmul.bf16.gmra.mxu0 %v1215
    %v1324 = vpop.f32.mrf.mxu0
    %v1325 = vadd.f32 %v1235, %v1324
    %v1326 = vpop.f32.mrf.mxu0
    %v1327 = vadd.f32 %v1235, %v1326
    %1328 = vmatmul.bf16.gmra.mxu0 %v1216
    %v1329 = vpop.f32.mrf.mxu0
    %v1330 = vadd.f32 %v1235, %v1329
    %v1331 = vpop.f32.mrf.mxu0
    %v1332 = vadd.f32 %v1235, %v1331
    %1333 = vdwg.mxu0
    %v1334 = vmax.f32 %v1295, 0.0
    %v1335 = vmax.f32 %v1297, 0.0
    %v1336 = vmax.f32 %v1300, 0.0
    %v1337 = vmax.f32 %v1302, 0.0
    %v1338 = vmax.f32 %v1305, 0.0
    %v1339 = vmax.f32 %v1307, 0.0
    %v1340 = vmax.f32 %v1310, 0.0
    %v1341 = vmax.f32 %v1312, 0.0
    %v1342 = vmax.f32 %v1315, 0.0
    %v1343 = vmax.f32 %v1317, 0.0
    %v1344 = vmax.f32 %v1320, 0.0
    %v1345 = vmax.f32 %v1322, 0.0
    %v1346 = vmax.f32 %v1325, 0.0
    %v1347 = vmax.f32 %v1327, 0.0
    %v1348 = vmax.f32 %v1330, 0.0
    %v1349 = vmax.f32 %v1332, 0.0
    %v1350 = vpack.c.bf16 %v1335, %v1334
    %v1351 = vpack.c.bf16 %v1337, %v1336
    %v1352 = vpack.c.bf16 %v1339, %v1338
    %v1353 = vpack.c.bf16 %v1341, %v1340
    %v1354 = vpack.c.bf16 %v1343, %v1342
    %v1355 = vpack.c.bf16 %v1345, %v1344
    %v1356 = vpack.c.bf16 %v1347, %v1346
    %v1357 = vpack.c.bf16 %v1349, %v1348
    %v1358 = vld [vmem:[%s9] sm:$0x1]
    %1359 = vmatpush.bf16.xpose.msra.mxu0 %v1357
    %1360 = vmatpush.bf16.xpose.msra.mxu0 %v1356
    %1361 = vmatpush.bf16.xpose.msra.mxu0 %v1355
    %1362 = vmatpush.bf16.xpose.msra.mxu0 %v1354
    %1363 = vmatpush.bf16.xpose.msra.mxu0 %v1353
    %1364 = vmatpush.bf16.xpose.msra.mxu0 %v1352
    %1365 = vmatpush.bf16.xpose.msra.mxu0 %v1351
    %1366 = vmatpush.bf16.xpose.msra.mxu0 %v1350
    %1367 = vmatmul.bf16.gmra.mxu0 %v1358
    %v1368 = vpop.f32.mrf.mxu0
    %v1369 = vadd.f32 0.0, %v1368
    %v1370 = vpop.f32.mrf.mxu0
    %1371 = vdwg.mxu0
    %1372 = vst [vmem:[#allocation7] sm:$0x1] %v1369
    // Predicated region
    $region50: #{tpu_custom_call.1} parent=1 // pred_check
      _
    $region51: #{tpu_custom_call.1} parent=1 // pred_check_branch
      %1374 = sbr.rel (0) target = $region53
    $region52: #{tpu_custom_call.1} parent=1 // pred_region
      %1376 = vsyncadd [#allocation4], 0
      %s1378 = sshll.u32 [#allocation7], 4
      %s1379 = int_to_ptr.vmem [resolvable:$true] %s1378
      %s1380 = sshll.u32 %s10, 4
      %s1381 = int_to_ptr.hbm [resolvable:$true] %s1380
      %1383 = dma.vmem_to_hbm [thread:$0]  %s1379, 16, %s1381, [#allocation4]
    $region53: #{tpu_custom_call.1} parent=1 // pred_fallthru
      _
    // Predicated region
    $region54: #{tpu_custom_call.1} parent=1 // pred_check
      _
    $region55: #{tpu_custom_call.1} parent=1 // pred_check_branch
      %1385 = sbr.rel (0) target = $region57
    $region56: #{tpu_custom_call.1} parent=1 // pred_region
      %1387 = dma.done [#allocation4], 16
    $region57: #{tpu_custom_call.1} parent=1 // pred_fallthru
      _
    %1388 = vsyncpa [#allocation3], 1
    %1389 = vsyncpa [#allocation6], 1
    %1390 = vsyncpa [#allocation4], 1

</llo_original>
